<compile_context>
chip_gen: v7x
topology: tpu7x:2x2x1
jax: 0.10.0
libtpu: 0.0.40
codegen_flags: <defaults>
</compile_context>

<pallas_src>
import math

import jax
import jax.numpy as jnp
from jax.experimental import pallas as pl
from jax.experimental.pallas import tpu as pltpu

_LANE = 128
_SUBLANE = 8


def _gate_kernel(xf_ref, xg_ref, o_ref):
    # xf_ref / xg_ref blocks: (1, 1, br, cols); o_ref block: (1, br, cols).
    xf = xf_ref[0, 0].astype(jnp.float32)
    xg = xg_ref[0, 0].astype(jnp.float32)
    f = jnp.tanh(xf)
    # sigmoid(g) == 0.5 * (1 + tanh(0.5 * g)): one EUP push instead of exp+recip.
    g = 0.5 * (jnp.tanh(0.5 * xg) + 1.0)
    o_ref[0] = (f * g).astype(o_ref.dtype)


def _round_up(v, m):
    return ((v + m - 1) // m) * m


def _choose_cols(length, max_cols=4096):
    """`length` is a multiple of 128.  Pick the largest lane extent `cols`
    (multiple of 128, <= max_cols) dividing `length` whose row count is
    sublane-dense (>= 8); fall back to 128."""
    best = _LANE
    for cols in range(2 * _LANE, min(length, max_cols) + 1, _LANE):
        if length % cols == 0 and length // cols >= _SUBLANE:
            best = cols
    return best


def _choose_row_block(rows, cols, itemsize, target_block_bytes):
    """Row-block size: either the full row extent, or a multiple of 8 sized to
    ~target_block_bytes, preferring one that divides `rows` (no ragged tail)."""
    budget = max(_SUBLANE,
                 (target_block_bytes // (cols * itemsize)) // _SUBLANE * _SUBLANE)
    if budget >= rows:
        return rows                      # single full-extent row block (always legal)
    br = budget                          # multiple of 8, < rows
    if rows % br != 0:
        # Snap to a divisor of rows if one exists without shrinking > 2x.
        for cand in range(br - _SUBLANE, max(_SUBLANE, br // 2) - 1, -_SUBLANE):
            if rows % cand == 0:
                br = cand
                break
    return br


def _even_grid_row_block(n, rows, br):
    """Best effort: make n * cdiv(rows, br) even so v7x's two TensorCores get a
    balanced split.  No-op on single-TC chips / when already even."""
    if rows <= _SUBLANE:
        return br
    nrb = pl.cdiv(rows, br)
    if (n * nrb) % 2 == 0:
        return br
    cap = (rows // _SUBLANE) * _SUBLANE          # largest legal multiple of 8 <= rows
    best = None
    for target in range(max(2, nrb - 1), nrb + 9):
        cand = min(max(_SUBLANE, _round_up(pl.cdiv(rows, target), _SUBLANE)), cap)
        if (n * pl.cdiv(rows, cand)) % 2 == 0:
            if best is None or abs(cand - br) < abs(best - br):
                best = cand
    return br if best is None else best


def gate(x, *, target_block_bytes=4 * 1024 * 1024):
    """Gate forward: chunk on dim 1, tanh(xf) * sigmoid(xg).

    x: (N, C, ...) with C even.  Returns (N, C // 2, ...).
    """
    assert x.ndim >= 2, "Gate expects at least (N, C)"
    n, c = x.shape[0], x.shape[1]
    assert c % 2 == 0, "channel dim must be even for chunk(2)"
    rest = tuple(x.shape[2:])
    half_c = c // 2
    flat_half = half_c * math.prod(rest) if rest else half_c
    itemsize = x.dtype.itemsize

    # Free, metadata-only view: first `flat_half` elements per batch row = xf,
    # next `flat_half` = xg.
    x3 = x.reshape(n, 2, flat_half)

    # Lane-dense layout: pad the per-half length to a multiple of 128 only if
    # needed (costs one extra HBM copy, but keeps every store unmasked and the
    # block size bounded -- never one giant block per half).
    padded_len = _round_up(flat_half, _LANE)
    if padded_len != flat_half:
        x3 = jnp.pad(x3, ((0, 0), (0, 0), (0, padded_len - flat_half)))

    cols = _choose_cols(padded_len)
    rows = padded_len // cols
    x4 = x3.reshape(n, 2, rows, cols)

    br = _choose_row_block(rows, cols, itemsize, target_block_bytes)
    br = _even_grid_row_block(n, rows, br)
    nrb = pl.cdiv(rows, br)

    # Explicit scoped-VMEM budget: 3 refs x 2 buffers x block + headroom,
    # clamped under v7x's 64 MiB physical ceiling.
    block_bytes = br * cols * itemsize
    vmem_limit = int(min(max(6 * block_bytes + (4 << 20), 16 << 20), 48 << 20))

    out_elems = n * flat_half
    cost = pl.CostEstimate(
        flops=4 * out_elems,
        transcendentals=2 * out_elems,
        bytes_accessed=int(3 * out_elems * itemsize),
    )

    out3 = pl.pallas_call(
        _gate_kernel,
        out_shape=jax.ShapeDtypeStruct((n, rows, cols), x.dtype),
        grid=(n, nrb),
        in_specs=[
            pl.BlockSpec((1, 1, br, cols), lambda i, j: (i, 0, j, 0)),  # xf half
            pl.BlockSpec((1, 1, br, cols), lambda i, j: (i, 1, j, 0)),  # xg half
        ],
        out_specs=pl.BlockSpec((1, br, cols), lambda i, j: (i, j, 0)),
        compiler_params=pltpu.CompilerParams(
            dimension_semantics=("parallel", "parallel"),
            vmem_limit_bytes=vmem_limit,
        ),
        cost_estimate=cost,
    )(x4, x4)

    out = out3.reshape(n, padded_len)
    if padded_len != flat_half:
        out = out[:, :flat_half]
    return out.reshape((n, half_c) + rest)


def _reference(x):
    xf, xg = jnp.split(x, 2, axis=1)
    return jnp.tanh(xf) * jax.nn.sigmoid(xg)


if __name__ == "__main__":
    key = jax.random.PRNGKey(0)

    # Main test: small NCHW input; C=8 so each chunk has 4 channels.
    x = jax.random.normal(key, (2, 8, 16, 16), dtype=jnp.float32)
    out = gate(x)
    jax.block_until_ready(out)
    ref = _reference(x)
    assert out.shape == ref.shape == (2, 4, 16, 16)
    assert jnp.allclose(out, ref, atol=1e-5, rtol=1e-5)

    # Fallback path test: per-half length not divisible by 128 (exercises the
    # lane-padding path instead of the old giant-block fallback).
    x2 = jax.random.normal(jax.random.PRNGKey(1), (2, 6, 7, 9), dtype=jnp.float32)
    out2 = gate(x2)
    jax.block_until_ready(out2)
    ref2 = _reference(x2)
    assert out2.shape == ref2.shape == (2, 3, 7, 9)
    assert jnp.allclose(out2, ref2, atol=1e-5, rtol=1e-5)

    print("KERNEL_OK")
</pallas_src>

<mosaic_0001>
module attributes {stable_mosaic.version = 11 : i64} {
  func.func @_gate_kernel(%arg0: i32, %arg1: i32, %arg2: memref<1x1x8x128xf32, #tpu.memory_space<vmem>>, %arg3: memref<1x1x8x128xf32, #tpu.memory_space<vmem>>, %arg4: memref<1x8x128xf32, #tpu.memory_space<vmem>>) attributes {dimension_semantics = [#tpu.dimension_semantics<parallel>, #tpu.dimension_semantics<parallel>], iteration_bounds = array<i64: 2, 1>, scalar_prefetch = 0 : i64, scratch_operands = 0 : i64, tpu.core_type = #tpu.core_type<tc>, window_params = [{transform_indices = @transform_0, window_bounds = array<i64: 1, 1, 8, 128>}, {transform_indices = @transform_1, window_bounds = array<i64: 1, 1, 8, 128>}, {transform_indices = @transform_2, window_bounds = array<i64: 1, 8, 128>}]} {
    %c0 = arith.constant 0 : index
    %c0_0 = arith.constant 0 : index
    %c0_1 = arith.constant 0 : index
    %c0_2 = arith.constant 0 : index
    %0 = vector.load %arg2[%c0, %c0_0, %c0_1, %c0_2] : memref<1x1x8x128xf32, #tpu.memory_space<vmem>>, vector<1x1x8x128xf32>
    %1 = vector.shape_cast %0 : vector<1x1x8x128xf32> to vector<8x128xf32>
    %c0_3 = arith.constant 0 : index
    %c0_4 = arith.constant 0 : index
    %c0_5 = arith.constant 0 : index
    %c0_6 = arith.constant 0 : index
    %2 = vector.load %arg3[%c0_3, %c0_4, %c0_5, %c0_6] : memref<1x1x8x128xf32, #tpu.memory_space<vmem>>, vector<1x1x8x128xf32>
    %3 = vector.shape_cast %2 : vector<1x1x8x128xf32> to vector<8x128xf32>
    %4 = math.tanh %1 : vector<8x128xf32>
    %cst = arith.constant 5.000000e-01 : f32
    %5 = vector.broadcast %cst : f32 to vector<8x128xf32>
    %6 = arith.mulf %5, %3 : vector<8x128xf32>
    %7 = math.tanh %6 : vector<8x128xf32>
    %cst_7 = arith.constant 1.000000e+00 : f32
    %8 = vector.broadcast %cst_7 : f32 to vector<8x128xf32>
    %9 = arith.addf %7, %8 : vector<8x128xf32>
    %cst_8 = arith.constant 5.000000e-01 : f32
    %10 = vector.broadcast %cst_8 : f32 to vector<8x128xf32>
    %11 = arith.mulf %10, %9 : vector<8x128xf32>
    %12 = arith.mulf %4, %11 : vector<8x128xf32>
    %c0_9 = arith.constant 0 : index
    %c0_10 = arith.constant 0 : index
    %c0_11 = arith.constant 0 : index
    %13 = vector.load %arg4[%c0_9, %c0_10, %c0_11] : memref<1x8x128xf32, #tpu.memory_space<vmem>>, vector<1x8x128xf32>
    %14 = vector.shape_cast %13 : vector<1x8x128xf32> to vector<8x128xf32>
    %15 = vector.shape_cast %12 : vector<8x128xf32> to vector<1x8x128xf32>
    tpu.vector_store %arg4[%c0_9, %c0_10, %c0_11], %15 {strides = array<i32>} : memref<1x8x128xf32, #tpu.memory_space<vmem>>, vector<1x8x128xf32>,
    return
  }
  func.func @transform_0(%arg0: i32, %arg1: i32) -> (i32, i32, i32, i32) {
    %c0_i32 = arith.constant 0 : i32
    %c0_i32_0 = arith.constant 0 : i32
    %c0_i32_1 = arith.constant 0 : i32
    return %arg0, %c0_i32, %arg1, %c0_i32_0 : i32, i32, i32, i32
  }
  func.func @transform_1(%arg0: i32, %arg1: i32) -> (i32, i32, i32, i32) {
    %c1_i32 = arith.constant 1 : i32
    %c0_i32 = arith.constant 0 : i32
    %c0_i32_0 = arith.constant 0 : i32
    return %arg0, %c1_i32, %arg1, %c0_i32 : i32, i32, i32, i32
  }
  func.func @transform_2(%arg0: i32, %arg1: i32) -> (i32, i32, i32) {
    %c0_i32 = arith.constant 0 : i32
    %c0_i32_0 = arith.constant 0 : i32
    return %arg0, %arg1, %c0_i32 : i32, i32, i32
  }
}

</mosaic_0001>

<llo_original>
// kernel: tpu_custom_call.1
$region0: #{tpu_custom_call.1}
  #allocation0 [shape = 'u32[]', space=smem, size = 0x4, offset = 0x4, fixed_abs, tag = 'smem constant byte address 0x4 - core index']
  #allocation1 [shape = 'u32[144,128]{1,0:T(1,128)}', space=vmem, size = 0x12000, scoped, tag = 'internal scratch']
  %s0 = inlined_call_operand.hbm [shape: f32[2,2,8,128], index: 0, kind: input, shape index: {}]
  %s1 = inlined_call_operand.hbm [shape: f32[2,2,8,128], index: 1, kind: input, shape index: {}]
  %s2 = inlined_call_operand.hbm [shape: f32[2,8,128], index: 2, kind: output, shape index: {}]
  %s3 = sld [smem:[#allocation0]]
  $region49: #{tpu_custom_call.1} parent=0
    _
  %s5 = ssub.s32 1, %s3
  %s6 = scalar_select 0, %s5, %s3
  $region1: #{tpu_custom_call.1} parent=0
    #allocation2 [shape = 'u8[8192]{0}', space=vmem, size = 0x2000, scoped, tag = 'input window, operand 0']
    #allocation3 [shape = 's32[2]{0}', space=sflag, size = 0x8, scoped, tag = 'scoped memory for tpu_custom_call.1']
    #allocation4 [shape = 's32[2]{0}', space=sflag, size = 0x8, scoped, tag = 'scoped memory for tpu_custom_call.1']
    #allocation5 [shape = 'u8[8192]{0}', space=vmem, size = 0x2000, scoped, tag = 'input window, operand 1']
    #allocation6 [shape = 's32[2]{0}', space=sflag, size = 0x8, scoped, tag = 'scoped memory for tpu_custom_call.1']
    #allocation7 [shape = 'u8[8192]{0}', space=vmem, size = 0x2000, scoped, tag = 'output window, operand 0']
    %7 = vsyncpa [#allocation3], 0
    %s8 = scalar_lea.sflag [#allocation3], 1
    %9 = vsyncpa %s8, 0
    %10 = vsyncpa [#allocation6], 0
    %s11 = scalar_lea.sflag [#allocation6], 1
    %12 = vsyncpa %s11, 0
    %13 = vsyncpa [#allocation4], 0
    %s14 = scalar_lea.sflag [#allocation4], 1
    %15 = vsyncpa %s14, 0
    loop: start=0, step=1, limit=4
    $region2: #{tpu_custom_call.1} parent=1 // loop_pre_header
      _
    $region3: #{tpu_custom_call.1} parent=1 // loop_header
      %s17 = sphi 0, %s21
      %p18 = scmp.ge.s32.totalorder %s17, 4
      %s24 = sphi 0, %s36
      %s25 = sphi 0, %s32
      %s26 = sphi 0, %s24
      %s27 = sphi 0, %s25
      %s28 = sphi 0, %s26
      %s29 = sphi 0, %s27
      %s41 = sphi 0, %s43
      %s44 = sphi 0, %s41
      %s45 = sphi 0, %s44
      %s61 = sphi 0, %s45
      %s69 = sphi 0, %s71
      %s72 = sphi 0, %s69
      %s73 = sphi 0, %s72
      %s89 = sphi 0, %s73
      %s97 = sphi 0, %s99
      %s100 = sphi 0, %s97
      %s101 = sphi 0, %s100
      %s117 = sphi 0, %s101
    $region4: #{tpu_custom_call.1} parent=1 // loop_header_branch
      %20 = sbr.rel (%p18) target = $region8
    $region5: #{tpu_custom_call.1} parent=1 // loop_body
      %s22 = ssub.s32 %s17, 1
      %s23 = ssub.s32 %s17, 2
      %s30 = sadd.s32 1, %s25
      %p31 = scmp.ge.s32.totalorder %s30, 1
      %s32 = scalar_select %p31, 0, %s30
      %s33 = sadd.s32 1, %s24
      %s34 = scalar_select %p31, %s33, %s24
      %p35 = scmp.ge.s32.totalorder %s34, 2
      %s36 = scalar_select %p35, 0, %s34
      %s37 = ssub.s32 %s24, %s36
      %s38 = ssub.s32 %s25, %s32
      %s39 = sor.u32 %s37, %s38
      %p40 = scmp.eq.s32.totalorder %s39, 0
      %s42 = sadd.s32 %s41, 1
      %s43 = scalar_select %p40, %s41, %s42
      %p46 = pneg %p40
      %p47 = scmp.eq.s32.totalorder %s17, 1
      %p48 = por %p46, %p47
      %p49 = scmp.ne.s32.totalorder %s41, %s44
      %p50 = scmp.eq.s32.totalorder %s17, 0
      %p51 = por %p49, %p50
      %p52 = scmp.ne.s32.totalorder %s41, %s44
      %p53 = scmp.eq.s32.totalorder %s22, 1
      %p54 = por %p52, %p53
      %p55 = scmp.ne.s32.totalorder %s44, %s45
      %p56 = scmp.eq.s32.totalorder %s22, 0
      %p57 = por %p55, %p56
      %p58 = scmp.ne.s32.totalorder %s44, %s45
      %p59 = scmp.eq.s32.totalorder %s23, 1
      %p60 = por %p58, %p59
      %p62 = scmp.ne.s32.totalorder %s45, %s61
      %p63 = scmp.eq.s32.totalorder %s23, 0
      %p64 = por %p62, %p63
      %s65 = ssub.s32 %s24, %s36
      %s66 = ssub.s32 %s25, %s32
      %s67 = sor.u32 %s65, %s66
      %p68 = scmp.eq.s32.totalorder %s67, 0
      %s70 = sadd.s32 %s69, 1
      %s71 = scalar_select %p68, %s69, %s70
      %p74 = pneg %p68
      %p75 = scmp.eq.s32.totalorder %s17, 1
      %p76 = por %p74, %p75
      %p77 = scmp.ne.s32.totalorder %s69, %s72
      %p78 = scmp.eq.s32.totalorder %s17, 0
      %p79 = por %p77, %p78
      %p80 = scmp.ne.s32.totalorder %s69, %s72
      %p81 = scmp.eq.s32.totalorder %s22, 1
      %p82 = por %p80, %p81
      %p83 = scmp.ne.s32.totalorder %s72, %s73
      %p84 = scmp.eq.s32.totalorder %s22, 0
      %p85 = por %p83, %p84
      %p86 = scmp.ne.s32.totalorder %s72, %s73
      %p87 = scmp.eq.s32.totalorder %s23, 1
      %p88 = por %p86, %p87
      %p90 = scmp.ne.s32.totalorder %s73, %s89
      %p91 = scmp.eq.s32.totalorder %s23, 0
      %p92 = por %p90, %p91
      %s93 = ssub.s32 %s24, %s36
      %s94 = ssub.s32 %s25, %s32
      %s95 = sor.u32 %s93, %s94
      %p96 = scmp.eq.s32.totalorder %s95, 0
      %s98 = sadd.s32 %s97, 1
      %s99 = scalar_select %p96, %s97, %s98
      %p102 = pneg %p96
      %p103 = scmp.eq.s32.totalorder %s17, 1
      %p104 = por %p102, %p103
      %p105 = scmp.ne.s32.totalorder %s97, %s100
      %p106 = scmp.eq.s32.totalorder %s17, 0
      %p107 = por %p105, %p106
      %p108 = scmp.ne.s32.totalorder %s97, %s100
      %p109 = scmp.eq.s32.totalorder %s22, 1
      %p110 = por %p108, %p109
      %p111 = scmp.ne.s32.totalorder %s100, %s101
      %p112 = scmp.eq.s32.totalorder %s22, 0
      %p113 = por %p111, %p112
      %p114 = scmp.ne.s32.totalorder %s100, %s101
      %p115 = scmp.eq.s32.totalorder %s23, 1
      %p116 = por %p114, %p115
      %p118 = scmp.ne.s32.totalorder %s101, %s117
      %p119 = scmp.eq.s32.totalorder %s23, 0
      %p120 = por %p118, %p119
      %p121 = scmp.le.s32.totalorder 1, %s17
      %p122 = scmp.lt.s32.totalorder %s17, 3
      %p123 = pnand %p121, %p122
      %p124 = pneg %p123
      // Predicated region
      $region9: #{tpu_custom_call.1} parent=5 // pred_check
        _
      $region10: #{tpu_custom_call.1} parent=5 // pred_check_branch
        %126 = sbr.rel (%p123) target = $region12
      $region11: #{tpu_custom_call.1} parent=5 // pred_region
        %s127 = ssub.s32 %s17, 1
      $region12: #{tpu_custom_call.1} parent=5 // pred_fallthru
        _
      %p128 = scmp.lt.s32.totalorder %s17, 2
      // Predicated region
      $region13: #{tpu_custom_call.1} parent=5 // pred_check
        %p129 = pneg %p128
      $region14: #{tpu_custom_call.1} parent=5 // pred_check_branch
        %131 = sbr.rel (%p129) target = $region16
      $region15: #{tpu_custom_call.1} parent=5 // pred_region
        // Predicated region
        $region17: #{tpu_custom_call.1} parent=15 // pred_check
          %p132 = pneg %p51
        $region18: #{tpu_custom_call.1} parent=15 // pred_check_branch
          %134 = sbr.rel (%p132) target = $region20
        $region19: #{tpu_custom_call.1} parent=15 // pred_region
          %s135 = sand.u32 %s41, 1
          %s136 = scalar_lea.sflag [#allocation3], %s135
          %s137 = sand.u32 %s41, 1
          %s138 = smul.addr %s137, 8
          %s139 = scalar_lea.vmem [#allocation2], %s138
          %s141 = ssub.s32 128, 128
          %142 = vsyncadd %s136, %s141
          %s143 = smul.addr %s24, 2
          %s144 = sadd.s32 %s25, %s143
          %s145 = smul.addr %s144, 128
          %s146 = scalar_lea.hbm %s0, %s145
          %s148 = sshll.u32 %s139, 4
          %s149 = int_to_ptr.vmem [resolvable:$true] %s148
          %151 = dma.hbm_to_vmem [thread:$0]  %s146, 128, %s149, %s136
        $region20: #{tpu_custom_call.1} parent=15 // pred_fallthru
          _
        // Predicated region
        $region21: #{tpu_custom_call.1} parent=15 // pred_check
          %p152 = pneg %p79
        $region22: #{tpu_custom_call.1} parent=15 // pred_check_branch
          %154 = sbr.rel (%p152) target = $region24
        $region23: #{tpu_custom_call.1} parent=15 // pred_region
          %s155 = sand.u32 %s69, 1
          %s156 = scalar_lea.sflag [#allocation6], %s155
          %s157 = sand.u32 %s69, 1
          %s158 = smul.addr %s157, 8
          %s159 = scalar_lea.vmem [#allocation5], %s158
          %s161 = ssub.s32 128, 128
          %162 = vsyncadd %s156, %s161
          %s163 = sadd.s32 %s25, 1
          %s164 = smul.addr %s24, 2
          %s165 = sadd.s32 %s163, %s164
          %s166 = smul.addr %s165, 128
          %s167 = scalar_lea.hbm %s1, %s166
          %s169 = sshll.u32 %s159, 4
          %s170 = int_to_ptr.vmem [resolvable:$true] %s169
          %172 = dma.hbm_to_vmem [thread:$0]  %s167, 128, %s170, %s156
        $region24: #{tpu_custom_call.1} parent=15 // pred_fallthru
          _
      $region16: #{tpu_custom_call.1} parent=5 // pred_fallthru
        _
      %p173 = scmp.le.s32.totalorder 1, %s17
      %p174 = scmp.lt.s32.totalorder %s17, 3
      %p175 = pnand %p173, %p174
      %p176 = pneg %p175
      // Predicated region
      $region25: #{tpu_custom_call.1} parent=5 // pred_check
        _
      $region26: #{tpu_custom_call.1} parent=5 // pred_check_branch
        %178 = sbr.rel (%p175) target = $region28
      $region27: #{tpu_custom_call.1} parent=5 // pred_region
        %s179 = ssub.s32 %s17, 1
        %s180 = sand.u32 %s44, 1
        %s181 = scalar_lea.sflag [#allocation3], %s180
        %s182 = sand.u32 %s44, 1
        %s183 = smul.addr %s182, 8
        %s184 = scalar_lea.vmem [#allocation2], %s183
        // Predicated region
        $region29: #{tpu_custom_call.1} parent=27 // pred_check
          %p185 = pneg %p57
        $region30: #{tpu_custom_call.1} parent=27 // pred_check_branch
          %187 = sbr.rel (%p185) target = $region32
        $region31: #{tpu_custom_call.1} parent=27 // pred_region
          %188 = dma.done %s181, 128
        $region32: #{tpu_custom_call.1} parent=27 // pred_fallthru
          _
        %s189 = sand.u32 %s72, 1
        %s190 = scalar_lea.sflag [#allocation6], %s189
        %s191 = sand.u32 %s72, 1
        %s192 = smul.addr %s191, 8
        %s193 = scalar_lea.vmem [#allocation5], %s192
        // Predicated region
        $region33: #{tpu_custom_call.1} parent=27 // pred_check
          %p194 = pneg %p85
        $region34: #{tpu_custom_call.1} parent=27 // pred_check_branch
          %196 = sbr.rel (%p194) target = $region36
        $region35: #{tpu_custom_call.1} parent=27 // pred_region
          %197 = dma.done %s190, 128
        $region36: #{tpu_custom_call.1} parent=27 // pred_fallthru
          _
        %s198 = sand.u32 %s44, 1
        %s199 = scalar_lea.sflag [#allocation3], %s198
        %s200 = sand.u32 %s44, 1
        %s201 = smul.addr %s200, 8
        %s202 = scalar_lea.vmem [#allocation2], %s201
        %p203 = pneg %p57
        %p204 = pneg %p54
        %s205 = sand.u32 %s72, 1
        %s206 = scalar_lea.sflag [#allocation6], %s205
        %s207 = sand.u32 %s72, 1
        %s208 = smul.addr %s207, 8
        %s209 = scalar_lea.vmem [#allocation5], %s208
        %p210 = pneg %p85
        %p211 = pneg %p82
        %p212 = pneg %p113
        %p213 = pneg %p110
        %s214 = sand.u32 %s100, 1
        %s215 = scalar_lea.sflag [#allocation4], %s214
        %s216 = sand.u32 %s100, 1
        %s217 = smul.addr %s216, 8
        %s218 = scalar_lea.vmem [#allocation7], %s217
        %v219 = vld [vmem:[%s184] sm:$0xff]
        %v220 = vld [vmem:[%s193] sm:$0xff]
        %v221 = vtanh.pop %v219
        %v222 = vmul.f32 %v220, 0.5
        %v223 = vtanh.pop %v222
        %v224 = vadd.f32 %v223, 1.0
        %v225 = vmul.f32 %v224, 0.5
        %v226 = vmul.f32 %v221, %v225
        %227 = vst [vmem:[%s218] sm:$0xff] %v226
        %s228 = sand.u32 %s100, 1
        %s229 = scalar_lea.sflag [#allocation4], %s228
        %s230 = sand.u32 %s100, 1
        %s231 = smul.addr %s230, 8
        %s232 = scalar_lea.vmem [#allocation7], %s231
        // Predicated region
        $region37: #{tpu_custom_call.1} parent=27 // pred_check
          %p233 = pneg %p110
        $region38: #{tpu_custom_call.1} parent=27 // pred_check_branch
          %235 = sbr.rel (%p233) target = $region40
        $region39: #{tpu_custom_call.1} parent=27 // pred_region
          %s237 = ssub.s32 128, 128
          %238 = vsyncadd %s229, %s237
          %s239 = sadd.s32 %s27, %s26
          %s240 = smul.addr %s239, 128
          %s241 = scalar_lea.hbm %s2, %s240
          %s243 = sshll.u32 %s232, 4
          %s244 = int_to_ptr.vmem [resolvable:$true] %s243
          %246 = dma.vmem_to_hbm [thread:$0]  %s244, 128, %s241, %s229
        $region40: #{tpu_custom_call.1} parent=27 // pred_fallthru
          _
      $region28: #{tpu_custom_call.1} parent=5 // pred_fallthru
        _
      %p247 = scmp.le.s32.totalorder 2, %s17
      // Predicated region
      $region41: #{tpu_custom_call.1} parent=5 // pred_check
        %p248 = pneg %p247
      $region42: #{tpu_custom_call.1} parent=5 // pred_check_branch
        %250 = sbr.rel (%p248) target = $region44
      $region43: #{tpu_custom_call.1} parent=5 // pred_region
        %s251 = ssub.s32 %s17, 2
        // Predicated region
        $region45: #{tpu_custom_call.1} parent=43 // pred_check
          %p252 = pneg %p116
        $region46: #{tpu_custom_call.1} parent=43 // pred_check_branch
          %254 = sbr.rel (%p252) target = $region48
        $region47: #{tpu_custom_call.1} parent=43 // pred_region
          %s255 = sand.u32 %s101, 1
          %s256 = scalar_lea.sflag [#allocation4], %s255
          %s257 = sand.u32 %s101, 1
          %s258 = smul.addr %s257, 8
          %s259 = scalar_lea.vmem [#allocation7], %s258
          %260 = dma.done %s256, 128
        $region48: #{tpu_custom_call.1} parent=43 // pred_fallthru
          _
      $region44: #{tpu_custom_call.1} parent=5 // pred_fallthru
        _
    $region6: #{tpu_custom_call.1} parent=1 // loop_footer
      %s21 = sadd.s32 1, %s17
    $region7: #{tpu_custom_call.1} parent=1 // loop_footer_branch
      %16 = sbr.rel target = $region3
    $region8: #{tpu_custom_call.1} parent=1 // loop_exit
      _
    %261 = vsyncpa [#allocation3], 1
    %s262 = scalar_lea.sflag [#allocation3], 1
    %263 = vsyncpa %s262, 1
    %264 = vsyncpa [#allocation6], 1
    %s265 = scalar_lea.sflag [#allocation6], 1
    %266 = vsyncpa %s265, 1
    %267 = vsyncpa [#allocation4], 1
    %s268 = scalar_lea.sflag [#allocation4], 1
    %269 = vsyncpa %s268, 1

</llo_original>
